<compile_context>
chip_gen: v7x
topology: tpu7x:2x2x1
jax: 0.10.0
libtpu: 0.0.40
codegen_flags: <defaults>
</compile_context>

<pallas_src>
import functools
import math

import jax
import jax.numpy as jnp
from jax.experimental import pallas as pl
from jax.experimental.pallas import tpu as pltpu

_LANE = 128
_BLOCK_ROWS = 2048     # 2048 * 128 * 4B = 1 MiB per f32 input block
_NUM_CORES = 2         # leading "parallel" axis; harmless no-op on 1-TC chips


def _normed_l1_partial_kernel(pred_ref, gt_ref, mask_ref,
                              abs_acc_ref, mask_acc_ref, *,
                              rows, block_rows, n_blocks, blocks_per_core,
                              needs_row_mask, needs_block_guard):
    c = pl.program_id(0)   # core / partial-sum slot ("parallel")
    j = pl.program_id(1)   # row-block within this core ("arbitrary")

    # Per-core accumulators live across the whole arbitrary axis.
    @pl.when(j == 0)
    def _init():
        abs_acc_ref[...] = jnp.zeros_like(abs_acc_ref)
        mask_acc_ref[...] = jnp.zeros_like(mask_acc_ref)

    blk = c * blocks_per_core + j

    def _accumulate():
        # Cast to f32 in-kernel (no host-side cast copies); accumulate in f32.
        p = pred_ref[...].astype(jnp.float32)
        g = gt_ref[...].astype(jnp.float32)
        m = mask_ref[...].astype(jnp.float32)

        diff = jnp.abs((p - g) * m)

        if needs_row_mask:
            # Ragged last block: rows >= `rows` hold unspecified data (possibly
            # NaN/Inf bit patterns), so mask with where (multiply is not safe).
            row_ids = blk * block_rows + jax.lax.broadcasted_iota(
                jnp.int32, (block_rows, _LANE), 0)
            valid = row_ids < rows
            diff = jnp.where(valid, diff, 0.0)
            m = jnp.where(valid, m, 0.0)

        # Sublane-direction reduce: vreg-wise VALU adds + one tiny intra-vreg
        # reduce.  The 128-lane reduction is deferred to the JAX wrapper.
        abs_acc_ref[...] += jnp.sum(diff, axis=0, keepdims=True)[None]
        mask_acc_ref[...] += jnp.sum(m, axis=0, keepdims=True)[None]

    if needs_block_guard:
        # Some (core, j) pairs fall past the last real block when n_blocks does
        # not split evenly across cores; skip them (their input index is
        # clamped in the index_map, so the DMA stays in bounds).
        pl.when(blk < n_blocks)(_accumulate)
    else:
        _accumulate()


def normed_l1_loss(pred, gt, mask):
    """Pallas implementation of NormedL1Loss.forward(pred, gt, mask)."""
    assert pred.shape == gt.shape == mask.shape
    batch = pred.shape[0]
    total = math.prod(pred.shape)

    # Pad only to a multiple of the lane count (<= 127 zero elements); zeros
    # contribute 0 to both sums.  No dtype cast, no full-block padding.
    pad = (-total) % _LANE

    def _prep(x):
        x = x.reshape(-1)
        if pad:
            # TODO(synk): for non-128-divisible totals jnp.pad still writes a
            # copy; a tail-handling path could avoid it, but it is rare.
            x = jnp.pad(x, (0, pad))
        return x.reshape(-1, _LANE)

    p2, g2, m2 = _prep(pred), _prep(gt), _prep(mask)
    rows = p2.shape[0]

    block_rows = _BLOCK_ROWS if rows >= _BLOCK_ROWS else rows  # full-dim block if small
    n_blocks = pl.cdiv(rows, block_rows)
    num_cores = max(1, min(_NUM_CORES, n_blocks))
    blocks_per_core = pl.cdiv(n_blocks, num_cores)
    grid = (num_cores, blocks_per_core)

    needs_row_mask = (rows % block_rows) != 0
    needs_block_guard = (blocks_per_core * num_cores) != n_blocks

    if needs_block_guard:
        def in_map(c, j):
            return (jnp.minimum(c * blocks_per_core + j, n_blocks - 1), 0)
    else:
        def in_map(c, j):
            return (c * blocks_per_core + j, 0)

    in_spec = pl.BlockSpec((block_rows, _LANE), in_map)
    acc_spec = pl.BlockSpec((1, 1, _LANE), lambda c, j: (c, 0, 0))

    kernel = functools.partial(
        _normed_l1_partial_kernel,
        rows=rows,
        block_rows=block_rows,
        n_blocks=n_blocks,
        blocks_per_core=blocks_per_core,
        needs_row_mask=needs_row_mask,
        needs_block_guard=needs_block_guard,
    )

    itemsize = jnp.dtype(pred.dtype).itemsize
    cost = pl.CostEstimate(
        flops=4 * total,
        transcendentals=0,
        bytes_accessed=3 * total * itemsize + 2 * num_cores * _LANE * 4,
    )

    abs_acc, mask_acc = pl.pallas_call(
        kernel,
        out_shape=(
            jax.ShapeDtypeStruct((num_cores, 1, _LANE), jnp.float32),
            jax.ShapeDtypeStruct((num_cores, 1, _LANE), jnp.float32),
        ),
        grid=grid,
        in_specs=[in_spec, in_spec, in_spec],
        out_specs=(acc_spec, acc_spec),
        compiler_params=pltpu.CompilerParams(
            dimension_semantics=("parallel", "arbitrary"),
        ),
        cost_estimate=cost,
    )(p2, g2, m2)

    # Deferred cross-lane / cross-core reductions + trivial scalar epilogue.
    abs_sum = jnp.sum(abs_acc)
    mask_sum = jnp.sum(mask_acc)

    loss = abs_sum / jnp.float32(batch)           # sum over [1,2,3] then mean over B
    num_pos = jnp.clip(mask_sum, 1.0, 1e30)
    return loss / num_pos


def _reference(pred, gt, mask):
    loss = jnp.abs(pred * mask - gt * mask)
    loss = jnp.sum(loss, axis=(1, 2, 3)).mean()
    num_pos = jnp.clip(jnp.sum(mask), 1.0, 1e30)
    return loss / num_pos


def _check(shape, key):
    k1, k2, k3 = jax.random.split(key, 3)
    pred = jax.random.normal(k1, shape, dtype=jnp.float32)
    gt = jax.random.normal(k2, shape, dtype=jnp.float32)
    mask = (jax.random.uniform(k3, shape) > 0.5).astype(jnp.float32)

    out = jax.block_until_ready(normed_l1_loss(pred, gt, mask))
    ref = jax.block_until_ready(_reference(pred, gt, mask))
    assert jnp.allclose(out, ref, rtol=2e-5, atol=1e-6), (shape, out, ref)


if __name__ == "__main__":
    key = jax.random.PRNGKey(0)
    k0, k1, k2 = jax.random.split(key, 3)

    # Primary small case from the module spec.
    _check((2, 4, 16, 16), k0)
    # Exercises the lane-padding path (total not a multiple of 128).
    _check((2, 3, 7, 11), k1)
    # Exercises multi-block grid, 2-core partials, ragged-last-block masking.
    _check((2, 6, 160, 160), k2)

    print("KERNEL_OK")
</pallas_src>

<mosaic_0001>
module attributes {stable_mosaic.version = 11 : i64} {
  func.func @_normed_l1_partial_kernel(%arg0: i32, %arg1: i32, %arg2: memref<16x128xf32, #tpu.memory_space<vmem>>, %arg3: memref<16x128xf32, #tpu.memory_space<vmem>>, %arg4: memref<16x128xf32, #tpu.memory_space<vmem>>, %arg5: memref<1x1x128xf32, #tpu.memory_space<vmem>>, %arg6: memref<1x1x128xf32, #tpu.memory_space<vmem>>) attributes {dimension_semantics = [#tpu.dimension_semantics<parallel>, #tpu.dimension_semantics<arbitrary>], iteration_bounds = array<i64: 1, 1>, scalar_prefetch = 0 : i64, scratch_operands = 0 : i64, tpu.core_type = #tpu.core_type<tc>, window_params = [{transform_indices = @transform_0, window_bounds = array<i64: 16, 128>}, {transform_indices = @transform_1, window_bounds = array<i64: 16, 128>}, {transform_indices = @transform_2, window_bounds = array<i64: 16, 128>}, {transform_indices = @transform_3, window_bounds = array<i64: 1, 1, 128>}, {transform_indices = @transform_4, window_bounds = array<i64: 1, 1, 128>}]} {
    %c0_i32 = arith.constant 0 : i32
    %0 = arith.cmpi eq, %arg1, %c0_i32 : i32
    %1 = arith.extui %0 : i1 to i32
    %c0_i32_0 = arith.constant 0 : i32
    %2 = arith.cmpi ne, %1, %c0_i32_0 : i32
    scf.if %2 {
      %cst_19 = arith.constant 0.000000e+00 : f32
      %21 = vector.broadcast %cst_19 : f32 to vector<1x1x128xf32>
      %c0_20 = arith.constant 0 : index
      %c0_21 = arith.constant 0 : index
      %c0_22 = arith.constant 0 : index
      %22 = vector.load %arg5[%c0_20, %c0_21, %c0_22] : memref<1x1x128xf32, #tpu.memory_space<vmem>>, vector<1x1x128xf32>
      tpu.vector_store %arg5[%c0_20, %c0_21, %c0_22], %21 {strides = array<i32>} : memref<1x1x128xf32, #tpu.memory_space<vmem>>, vector<1x1x128xf32>,
      %cst_23 = arith.constant 0.000000e+00 : f32
      %23 = vector.broadcast %cst_23 : f32 to vector<1x1x128xf32>
      %c0_24 = arith.constant 0 : index
      %c0_25 = arith.constant 0 : index
      %c0_26 = arith.constant 0 : index
      %24 = vector.load %arg6[%c0_24, %c0_25, %c0_26] : memref<1x1x128xf32, #tpu.memory_space<vmem>>, vector<1x1x128xf32>
      tpu.vector_store %arg6[%c0_24, %c0_25, %c0_26], %23 {strides = array<i32>} : memref<1x1x128xf32, #tpu.memory_space<vmem>>, vector<1x1x128xf32>,
    } else {
    }
    %c0 = arith.constant 0 : index
    %c0_1 = arith.constant 0 : index
    %3 = vector.load %arg2[%c0, %c0_1] : memref<16x128xf32, #tpu.memory_space<vmem>>, vector<16x128xf32>
    %c0_2 = arith.constant 0 : index
    %c0_3 = arith.constant 0 : index
    %4 = vector.load %arg3[%c0_2, %c0_3] : memref<16x128xf32, #tpu.memory_space<vmem>>, vector<16x128xf32>
    %c0_4 = arith.constant 0 : index
    %c0_5 = arith.constant 0 : index
    %5 = vector.load %arg4[%c0_4, %c0_5] : memref<16x128xf32, #tpu.memory_space<vmem>>, vector<16x128xf32>
    %6 = arith.subf %3, %4 : vector<16x128xf32>
    %7 = arith.mulf %6, %5 : vector<16x128xf32>
    %8 = math.absf %7 : vector<16x128xf32>
    %c0_6 = arith.constant 0 : index
    %c0_7 = arith.constant 0 : index
    %c0_8 = arith.constant 0 : index
    %9 = vector.load %arg5[%c0_6, %c0_7, %c0_8] : memref<1x1x128xf32, #tpu.memory_space<vmem>>, vector<1x1x128xf32>
    %cst = arith.constant dense<0.000000e+00> : vector<128xf32>
    %10 = vector.multi_reduction <add>, %8, %cst [0] : vector<16x128xf32> to vector<128xf32>
    %11 = vector.shape_cast %10 : vector<128xf32> to vector<1x128xf32>
    %12 = vector.shape_cast %11 : vector<1x128xf32> to vector<1x1x128xf32>
    %13 = arith.addf %9, %12 : vector<1x1x128xf32>
    %c0_9 = arith.constant 0 : index
    %c0_10 = arith.constant 0 : index
    %c0_11 = arith.constant 0 : index
    %14 = vector.load %arg5[%c0_9, %c0_10, %c0_11] : memref<1x1x128xf32, #tpu.memory_space<vmem>>, vector<1x1x128xf32>
    tpu.vector_store %arg5[%c0_9, %c0_10, %c0_11], %13 {strides = array<i32>} : memref<1x1x128xf32, #tpu.memory_space<vmem>>, vector<1x1x128xf32>,
    %c0_12 = arith.constant 0 : index
    %c0_13 = arith.constant 0 : index
    %c0_14 = arith.constant 0 : index
    %15 = vector.load %arg6[%c0_12, %c0_13, %c0_14] : memref<1x1x128xf32, #tpu.memory_space<vmem>>, vector<1x1x128xf32>
    %cst_15 = arith.constant dense<0.000000e+00> : vector<128xf32>
    %16 = vector.multi_reduction <add>, %5, %cst_15 [0] : vector<16x128xf32> to vector<128xf32>
    %17 = vector.shape_cast %16 : vector<128xf32> to vector<1x128xf32>
    %18 = vector.shape_cast %17 : vector<1x128xf32> to vector<1x1x128xf32>
    %19 = arith.addf %15, %18 : vector<1x1x128xf32>
    %c0_16 = arith.constant 0 : index
    %c0_17 = arith.constant 0 : index
    %c0_18 = arith.constant 0 : index
    %20 = vector.load %arg6[%c0_16, %c0_17, %c0_18] : memref<1x1x128xf32, #tpu.memory_space<vmem>>, vector<1x1x128xf32>
    tpu.vector_store %arg6[%c0_16, %c0_17, %c0_18], %19 {strides = array<i32>} : memref<1x1x128xf32, #tpu.memory_space<vmem>>, vector<1x1x128xf32>,
    return
  }
  func.func @transform_0(%arg0: i32, %arg1: i32) -> (i32, i32) {
    %c1_i32 = arith.constant 1 : i32
    %0 = arith.muli %arg0, %c1_i32 : i32
    %1 = arith.addi %0, %arg1 : i32
    %c0_i32 = arith.constant 0 : i32
    %c0_i32_0 = arith.constant 0 : i32
    return %1, %c0_i32 : i32, i32
  }
  func.func @transform_1(%arg0: i32, %arg1: i32) -> (i32, i32) {
    %c1_i32 = arith.constant 1 : i32
    %0 = arith.muli %arg0, %c1_i32 : i32
    %1 = arith.addi %0, %arg1 : i32
    %c0_i32 = arith.constant 0 : i32
    %c0_i32_0 = arith.constant 0 : i32
    return %1, %c0_i32 : i32, i32
  }
  func.func @transform_2(%arg0: i32, %arg1: i32) -> (i32, i32) {
    %c1_i32 = arith.constant 1 : i32
    %0 = arith.muli %arg0, %c1_i32 : i32
    %1 = arith.addi %0, %arg1 : i32
    %c0_i32 = arith.constant 0 : i32
    %c0_i32_0 = arith.constant 0 : i32
    return %1, %c0_i32 : i32, i32
  }
  func.func @transform_3(%arg0: i32, %arg1: i32) -> (i32, i32, i32) {
    %c0_i32 = arith.constant 0 : i32
    %c0_i32_0 = arith.constant 0 : i32
    %c0_i32_1 = arith.constant 0 : i32
    return %arg0, %c0_i32, %c0_i32_0 : i32, i32, i32
  }
  func.func @transform_4(%arg0: i32, %arg1: i32) -> (i32, i32, i32) {
    %c0_i32 = arith.constant 0 : i32
    %c0_i32_0 = arith.constant 0 : i32
    %c0_i32_1 = arith.constant 0 : i32
    return %arg0, %c0_i32, %c0_i32_0 : i32, i32, i32
  }
}

</mosaic_0001>

<llo_original>
// kernel: tpu_custom_call.1
$region0: #{tpu_custom_call.1}
  #allocation0 [shape = 'u32[]', space=smem, size = 0x4, offset = 0x4, fixed_abs, tag = 'smem constant byte address 0x4 - core index']
  #allocation1 [shape = 'u32[144,128]{1,0:T(1,128)}', space=vmem, size = 0x12000, scoped, tag = 'internal scratch']
  %s0 = inlined_call_operand.hbm [shape: f32[16,128], index: 0, kind: input, shape index: {}]
  %s1 = inlined_call_operand.hbm [shape: f32[16,128], index: 1, kind: input, shape index: {}]
  %s2 = inlined_call_operand.hbm [shape: f32[16,128], index: 2, kind: input, shape index: {}]
  %s3 = inlined_call_operand.hbm [shape: f32[1,1,128], index: 3, kind: output, shape index: {0}]
  %s4 = inlined_call_operand.hbm [shape: f32[1,1,128], index: 4, kind: output, shape index: {1}]
  %5 = xla_tuple %s3, %s4
  %s6 = sld [smem:[#allocation0]]
  $region46: #{tpu_custom_call.1} parent=0
    _
  %s8 = ssub.s32 1, %s6
  %s9 = scalar_select 0, %s8, %s6
  $region1: #{tpu_custom_call.1} parent=0
    #allocation2 [shape = 'u8[8192]{0}', space=vmem, size = 0x2000, scoped, tag = 'input window, operand 0, single buffered']
    #allocation3 [shape = 's32[1]{0}', space=sflag, size = 0x4, scoped, tag = 'scoped memory for tpu_custom_call.1']
    #allocation4 [shape = 's32[1]{0}', space=sflag, size = 0x4, scoped, tag = 'scoped memory for tpu_custom_call.1']
    #allocation5 [shape = 'u8[8192]{0}', space=vmem, size = 0x2000, scoped, tag = 'input window, operand 1, single buffered']
    #allocation6 [shape = 's32[1]{0}', space=sflag, size = 0x4, scoped, tag = 'scoped memory for tpu_custom_call.1']
    #allocation7 [shape = 'u8[8192]{0}', space=vmem, size = 0x2000, scoped, tag = 'input window, operand 2, single buffered']
    #allocation8 [shape = 'u8[512]{0}', space=vmem, size = 0x400, scoped, tag = 'output window, operand 0, single buffered']
    #allocation9 [shape = 'u8[512]{0}', space=vmem, size = 0x400, scoped, tag = 'output window, operand 1, single buffered']
    #allocation10 [shape = 's32[1]{0}', space=sflag, size = 0x4, scoped, tag = 'scoped memory for tpu_custom_call.1']
    %10 = vsyncpa [#allocation3], 0
    %11 = vsyncpa [#allocation6], 0
    %12 = vsyncpa [#allocation4], 0
    %13 = vsyncpa [#allocation10], 0
    // Predicated region
    $region2: #{tpu_custom_call.1} parent=1 // pred_check
      _
    $region3: #{tpu_custom_call.1} parent=1 // pred_check_branch
      %15 = sbr.rel (0) target = $region5
    $region4: #{tpu_custom_call.1} parent=1 // pred_region
      %s16 = sadd.s32 0, 0
      %s17 = smul.u32 2, %s16
      %s19 = ssub.s32 256, 256
      %20 = vsyncadd [#allocation3], %s19
      %s21 = smul.addr %s17, 128
      %s22 = scalar_lea.hbm %s0, %s21
      %s23 = sshll.u32 [#allocation2], 4
      %s24 = int_to_ptr.vmem [resolvable:$true] %s23
      %29 = dma.hbm_to_vmem [thread:$0]  %s22, 256, %s24, [#allocation3], 128, 128, 8
    $region5: #{tpu_custom_call.1} parent=1 // pred_fallthru
      _
    // Predicated region
    $region6: #{tpu_custom_call.1} parent=1 // pred_check
      _
    $region7: #{tpu_custom_call.1} parent=1 // pred_check_branch
      %31 = sbr.rel (0) target = $region9
    $region8: #{tpu_custom_call.1} parent=1 // pred_region
      %s32 = sadd.s32 0, 0
      %s33 = smul.u32 2, %s32
      %s35 = ssub.s32 256, 256
      %36 = vsyncadd [#allocation6], %s35
      %s37 = smul.addr %s33, 128
      %s38 = scalar_lea.hbm %s1, %s37
      %s39 = sshll.u32 [#allocation5], 4
      %s40 = int_to_ptr.vmem [resolvable:$true] %s39
      %45 = dma.hbm_to_vmem [thread:$0]  %s38, 256, %s40, [#allocation6], 128, 128, 8
    $region9: #{tpu_custom_call.1} parent=1 // pred_fallthru
      _
    // Predicated region
    $region10: #{tpu_custom_call.1} parent=1 // pred_check
      _
    $region11: #{tpu_custom_call.1} parent=1 // pred_check_branch
      %47 = sbr.rel (0) target = $region13
    $region12: #{tpu_custom_call.1} parent=1 // pred_region
      %s48 = sadd.s32 0, 0
      %s49 = smul.u32 2, %s48
      %s51 = ssub.s32 256, 256
      %52 = vsyncadd [#allocation6], %s51
      %s53 = smul.addr %s49, 128
      %s54 = scalar_lea.hbm %s2, %s53
      %s55 = sshll.u32 [#allocation7], 4
      %s56 = int_to_ptr.vmem [resolvable:$true] %s55
      %61 = dma.hbm_to_vmem [thread:$0]  %s54, 256, %s56, [#allocation6], 128, 128, 8
    $region13: #{tpu_custom_call.1} parent=1 // pred_fallthru
      _
    // Predicated region
    $region14: #{tpu_custom_call.1} parent=1 // pred_check
      _
    $region15: #{tpu_custom_call.1} parent=1 // pred_check_branch
      %63 = sbr.rel (0) target = $region17
    $region16: #{tpu_custom_call.1} parent=1 // pred_region
      %64 = dma.done [#allocation3], 256
    $region17: #{tpu_custom_call.1} parent=1 // pred_fallthru
      _
    // Predicated region
    $region18: #{tpu_custom_call.1} parent=1 // pred_check
      _
    $region19: #{tpu_custom_call.1} parent=1 // pred_check_branch
      %66 = sbr.rel (0) target = $region21
    $region20: #{tpu_custom_call.1} parent=1 // pred_region
      %67 = dma.done [#allocation6], 256
    $region21: #{tpu_custom_call.1} parent=1 // pred_fallthru
      _
    // Predicated region
    $region22: #{tpu_custom_call.1} parent=1 // pred_check
      _
    $region23: #{tpu_custom_call.1} parent=1 // pred_check_branch
      %69 = sbr.rel (0) target = $region25
    $region24: #{tpu_custom_call.1} parent=1 // pred_region
      %70 = dma.done [#allocation6], 256
    $region25: #{tpu_custom_call.1} parent=1 // pred_fallthru
      _
    %s71 = sadd.s32 0, 0
    %s72 = smul.u32 2, %s71
    %s73 = sadd.s32 0, 0
    %s74 = smul.u32 2, %s73
    %s75 = sadd.s32 0, 0
    %s76 = smul.u32 2, %s75
    %p77 = scmp.eq.s32.totalorder 0, 0
    // Predicated region
    $region26: #{tpu_custom_call.1} parent=1 // pred_check
      %p78 = pneg %p77
    $region27: #{tpu_custom_call.1} parent=1 // pred_check_branch
      %80 = sbr.rel (%p78) target = $region29
    $region28: #{tpu_custom_call.1} parent=1 // pred_region
      %81 = vst [vmem:[#allocation8] sm:$0x1] 0.0
      %82 = vst [vmem:[#allocation9] sm:$0x1] 0.0
    $region29: #{tpu_custom_call.1} parent=1 // pred_fallthru
      _
    %v83 = vld [vmem:[#allocation2] sm:$0xff]
    %v84 = vld [vmem:[#allocation2 + $0x8] sm:$0xff]
    %v85 = vld [vmem:[#allocation5] sm:$0xff]
    %v86 = vld [vmem:[#allocation5 + $0x8] sm:$0xff]
    %v87 = vld [vmem:[#allocation7] sm:$0xff]
    %v88 = vld [vmem:[#allocation7 + $0x8] sm:$0xff]
    %v89 = vsub.f32 %v83, %v85
    %v90 = vsub.f32 %v84, %v86
    %v91 = vmul.f32 %v89, %v87
    %v92 = vmul.f32 %v90, %v88
    %v93 = vand.u32 2147483647, %v91
    %v94 = vand.u32 2147483647, %v92
    %v95 = vld [vmem:[#allocation8] sm:$0x1]
    %v96 = vadd.f32 %v93, %v94
    %v97 = vrot.slane %v96, 4
    %v98 = vadd.f32 %v96, %v97
    %v99 = vrot.slane %v98, 2
    %v100 = vadd.f32 %v98, %v99
    %v101 = vrot.slane %v100, 1
    %v102 = vadd.f32 %v100, %v101
    %v103 = vadd.f32 %v95, %v102
    %104 = vst [vmem:[#allocation8] sm:$0x1] %v103
    %v105 = vld [vmem:[#allocation9] sm:$0x1]
    %v106 = vadd.f32 %v87, %v88
    %v107 = vrot.slane %v106, 4
    %v108 = vadd.f32 %v106, %v107
    %v109 = vrot.slane %v108, 2
    %v110 = vadd.f32 %v108, %v109
    %v111 = vrot.slane %v110, 1
    %v112 = vadd.f32 %v110, %v111
    %v113 = vadd.f32 %v105, %v112
    %114 = vst [vmem:[#allocation9] sm:$0x1] %v113
    // Predicated region
    $region30: #{tpu_custom_call.1} parent=1 // pred_check
      _
    $region31: #{tpu_custom_call.1} parent=1 // pred_check_branch
      %116 = sbr.rel (0) target = $region33
    $region32: #{tpu_custom_call.1} parent=1 // pred_region
      %s118 = ssub.s32 16, 16
      %119 = vsyncadd [#allocation4], %s118
      %s121 = sshll.u32 [#allocation8], 4
      %s122 = int_to_ptr.vmem [resolvable:$true] %s121
      %124 = dma.vmem_to_hbm [thread:$0]  %s122, 16, %s3, [#allocation4]
    $region33: #{tpu_custom_call.1} parent=1 // pred_fallthru
      _
    // Predicated region
    $region34: #{tpu_custom_call.1} parent=1 // pred_check
      _
    $region35: #{tpu_custom_call.1} parent=1 // pred_check_branch
      %126 = sbr.rel (0) target = $region37
    $region36: #{tpu_custom_call.1} parent=1 // pred_region
      %s128 = ssub.s32 16, 16
      %129 = vsyncadd [#allocation10], %s128
      %s131 = sshll.u32 [#allocation9], 4
      %s132 = int_to_ptr.vmem [resolvable:$true] %s131
      %134 = dma.vmem_to_hbm [thread:$0]  %s132, 16, %s4, [#allocation10]
    $region37: #{tpu_custom_call.1} parent=1 // pred_fallthru
      _
    // Predicated region
    $region38: #{tpu_custom_call.1} parent=1 // pred_check
      _
    $region39: #{tpu_custom_call.1} parent=1 // pred_check_branch
      %136 = sbr.rel (0) target = $region41
    $region40: #{tpu_custom_call.1} parent=1 // pred_region
      %137 = dma.done [#allocation4], 16
    $region41: #{tpu_custom_call.1} parent=1 // pred_fallthru
      _
    // Predicated region
    $region42: #{tpu_custom_call.1} parent=1 // pred_check
      _
    $region43: #{tpu_custom_call.1} parent=1 // pred_check_branch
      %139 = sbr.rel (0) target = $region45
    $region44: #{tpu_custom_call.1} parent=1 // pred_region
      %140 = dma.done [#allocation10], 16
    $region45: #{tpu_custom_call.1} parent=1 // pred_fallthru
      _
    %141 = vsyncpa [#allocation3], 1
    %142 = vsyncpa [#allocation6], 1
    %143 = vsyncpa [#allocation4], 1
    %144 = vsyncpa [#allocation10], 1

</llo_original>
